<compile_context>
chip_gen: v7x
topology: tpu7x:2x2x1
jax: 0.10.0
libtpu: 0.0.40
codegen_flags: <defaults>
</compile_context>

<pallas_src>
import jax
import jax.numpy as jnp
from jax.experimental import pallas as pl
from jax.experimental.pallas import tpu as pltpu


# ----------------------------------------------------------------------------
# Pallas kernel: one batch tile of BPR scores
#   score[b, k] = sum_d items[b, k, d] * u[b, d]
# items column 0 is the positive item, columns 1.. are negatives.
# Output is transposed (KP, TB) so stores are lane-dense along the batch axis.
# ----------------------------------------------------------------------------
def _bpr_score_kernel(u_ref, items_ref, out_ref):
    u = u_ref[...]                                    # (TB, D)   input dtype
    items = items_ref[...]                            # (TB, KI, D)

    # bf16 multiply (bf16 VALU on v6e/v7x; compiler upcasts on v5e),
    # f32 accumulate for the cross-lane reduce over D.
    prod = (items * u[:, None, :]).astype(jnp.float32)
    s = jnp.sum(prod, axis=-1)                        # (TB, KI) f32

    kp = out_ref.shape[0]                             # KI rounded up to 8
    ki = s.shape[1]
    if kp != ki:                                      # static trace-time padding
        s = jnp.concatenate(
            [s, jnp.zeros((s.shape[0], kp - ki), jnp.float32)], axis=1)

    # lane-dense store: batch tile sits on the 128-lane axis
    out_ref[...] = s.T                                # (KP, TB)


def _round_up(x, m):
    return ((x + m - 1) // m) * m


def _vmem_capacity_bytes():
    try:
        return int(pltpu.get_tpu_info().vmem_capacity_bytes)
    except Exception:
        return 64 * 1024 * 1024      # conservative default (v7x per-TC)


def _choose_batch_tile(batch, ki, dim, itemsize, vmem_cap):
    """Pick the batch tile TB from the *padded* per-tile VMEM footprint."""
    # padded tile shapes: bf16 min tile (16, 128), f32 (8, 128)
    sub = 16 if itemsize == 2 else (32 if itemsize == 1 else 8)
    d_pad = _round_up(dim, 128)
    ki_pad = _round_up(ki, sub)
    kp = _round_up(ki, 8)

    per_row = (
        2 * (ki_pad * d_pad + d_pad) * itemsize   # items + u DMA bufs, double-buffered
        + ki_pad * d_pad * 4                      # f32 product/accum intermediate
        + 2 * kp * 4                              # (KP, TB) f32 output, double-buffered
    )

    if vmem_cap >= 100 * 1024 * 1024:             # v5e / v6e: 128 MiB VMEM
        budget, row_cap = 40 * 1024 * 1024, 1024
    else:                                         # v7x: 64 MiB per TensorCore
        budget, row_cap = 20 * 1024 * 1024, 512

    rows = max(8, budget // per_row)

    if batch < 128:
        # single full-extent tile: block shape == array dims, no padding needed
        return batch

    tb = (min(rows, row_cap, batch) // 128) * 128
    if batch >= 256:
        # guarantee >= 2 grid steps: dual-TC sharding on v7x + pipeline overlap
        tb = min(tb, _round_up(pl.cdiv(batch, 2), 128))
    return max(128, tb)


def bpr_scores_pallas(u, items):
    """u: (B, D), items: (B, KI, D) -> scores (B, KI) float32.

    scores[b, k] = sum_d items[b, k, d] * u[b, d]
    """
    B, D = u.shape
    KI = items.shape[1]
    assert items.shape[0] == B and items.shape[2] == D

    vmem_cap = _vmem_capacity_bytes()
    TB = _choose_batch_tile(B, KI, D, u.dtype.itemsize, vmem_cap)
    KP = _round_up(KI, 8)
    vmem_limit = (64 * 1024 * 1024 if vmem_cap >= 100 * 1024 * 1024
                  else 48 * 1024 * 1024)

    scores_t = pl.pallas_call(
        _bpr_score_kernel,
        out_shape=jax.ShapeDtypeStruct((KP, B), jnp.float32),
        grid=(pl.cdiv(B, TB),),                       # ragged tail handled by Pallas
        in_specs=[
            pl.BlockSpec((TB, D), lambda b: (b, 0)),
            pl.BlockSpec((TB, KI, D), lambda b: (b, 0, 0)),
        ],
        out_specs=pl.BlockSpec((KP, TB), lambda b: (0, b)),
        compiler_params=pltpu.CompilerParams(
            dimension_semantics=("parallel",),        # independent batch tiles
            vmem_limit_bytes=vmem_limit,
        ),
    )(u, items)

    # tiny output: drop padded score columns, transpose back to (B, KI)
    return scores_t[:KI, :].T


# ----------------------------------------------------------------------------
# BaseGCN equivalent (JAX glue around the Pallas scoring kernel)
# ----------------------------------------------------------------------------
class BaseGCNPallas:
    def __init__(self, num_users, num_items, dim, key):
        ku, ki = jax.random.split(key)
        # bf16 tables: halves HBM traffic of the bandwidth-bound scoring path
        self.user_emb = (jax.random.normal(ku, (num_users, dim), jnp.float32)
                         * 0.1).astype(jnp.bfloat16)
        self.item_emb = (jax.random.normal(ki, (num_items, dim), jnp.float32)
                         * 0.1).astype(jnp.bfloat16)

    def computer(self):
        # identity propagation stand-in for the abstract GCN propagation
        return self.user_emb, self.item_emb

    def forward(self, batch_user, batch_pos_item, batch_neg_item):
        all_users, all_items = self.computer()
        u = all_users[batch_user]                                    # (B, D)
        # single fused gather: column 0 = positive item, 1.. = negatives
        idx = jnp.concatenate([batch_pos_item[:, None], batch_neg_item], axis=1)
        items = all_items[idx]                                       # (B, K+1, D)
        scores = bpr_scores_pallas(u, items)                         # (B, K+1) f32
        pos_score = scores[:, :1]                                    # (B, 1)
        neg_score = scores[:, 1:]                                    # (B, K)
        return pos_score, neg_score

    def forward_multi_items(self, batch_user, batch_items):
        all_users, all_items = self.computer()
        u = all_users[batch_user]                                    # (B, D)
        items = all_items[batch_items]                               # (B, k, D)
        return bpr_scores_pallas(u, items)                           # (B, k)

    def get_loss(self, output):
        pos_score, neg_score = output
        pos = jnp.broadcast_to(pos_score, neg_score.shape)
        return -jnp.sum(jnp.mean(jax.nn.log_sigmoid(pos - neg_score), axis=1))


if __name__ == "__main__":
    key = jax.random.PRNGKey(0)
    k_model, k_u, k_p, k_n = jax.random.split(key, 4)

    num_users, num_items, dim = 64, 96, 64
    batch_size, num_ns = 8, 4

    model = BaseGCNPallas(num_users, num_items, dim, k_model)

    batch_user = jax.random.randint(k_u, (batch_size,), 0, num_users)
    batch_pos_item = jax.random.randint(k_p, (batch_size,), 0, num_items)
    batch_neg_item = jax.random.randint(k_n, (batch_size, num_ns), 0, num_items)

    pos_score, neg_score = model.forward(batch_user, batch_pos_item, batch_neg_item)
    pos_score = jax.block_until_ready(pos_score)
    neg_score = jax.block_until_ready(neg_score)

    # pure-JAX reference with the SAME numerics (bf16 products, f32 accumulate)
    u_bf = model.user_emb[batch_user]
    i_bf = model.item_emb[batch_pos_item]
    j_bf = model.item_emb[batch_neg_item]
    pos_ref = jnp.sum((u_bf * i_bf).astype(jnp.float32), axis=1, keepdims=True)
    neg_ref = jnp.sum((j_bf * u_bf[:, None, :]).astype(jnp.float32), axis=-1)

    assert pos_score.shape == (batch_size, 1)
    assert neg_score.shape == (batch_size, num_ns)
    assert pos_score.dtype == jnp.float32 and neg_score.dtype == jnp.float32
    assert jnp.allclose(pos_score, pos_ref, atol=1e-3, rtol=1e-3)
    assert jnp.allclose(neg_score, neg_ref, atol=1e-3, rtol=1e-3)

    # forward_multi_items path reuses the same kernel
    multi = jax.block_until_ready(
        model.forward_multi_items(batch_user, batch_neg_item))
    assert multi.shape == (batch_size, num_ns)
    assert jnp.allclose(multi, neg_ref, atol=1e-3, rtol=1e-3)

    # loss path (pure JAX glue over kernel outputs)
    loss = jax.block_until_ready(model.get_loss((pos_score, neg_score)))
    assert loss.shape == ()
    assert bool(jnp.isfinite(loss))

    print("KERNEL_OK")
</pallas_src>

<mosaic_0001>
module attributes {stable_mosaic.version = 11 : i64} {
  func.func @_bpr_score_kernel(%arg0: i32, %arg1: memref<8x64xbf16, #tpu.memory_space<vmem>>, %arg2: memref<8x5x64xbf16, #tpu.memory_space<vmem>>, %arg3: memref<8x8xf32, #tpu.memory_space<vmem>>) attributes {dimension_semantics = [#tpu.dimension_semantics<parallel>], iteration_bounds = array<i64: 1>, scalar_prefetch = 0 : i64, scratch_operands = 0 : i64, tpu.core_type = #tpu.core_type<tc>, window_params = [{transform_indices = @transform_0, window_bounds = array<i64: 8, 64>}, {transform_indices = @transform_1, window_bounds = array<i64: 8, 5, 64>}, {transform_indices = @transform_2, window_bounds = array<i64: 8, 8>}]} {
    %c0 = arith.constant 0 : index
    %c0_0 = arith.constant 0 : index
    %0 = vector.load %arg1[%c0, %c0_0] : memref<8x64xbf16, #tpu.memory_space<vmem>>, vector<8x64xbf16>
    %c0_1 = arith.constant 0 : index
    %c0_2 = arith.constant 0 : index
    %c0_3 = arith.constant 0 : index
    %1 = vector.load %arg2[%c0_1, %c0_2, %c0_3] : memref<8x5x64xbf16, #tpu.memory_space<vmem>>, vector<8x5x64xbf16>
    %2 = vector.shape_cast %0 : vector<8x64xbf16> to vector<8x1x64xbf16>
    %3 = vector.broadcast %2 : vector<8x1x64xbf16> to vector<8x5x64xbf16>
    %4 = arith.mulf %1, %3 : vector<8x5x64xbf16>
    %5 = arith.extf %4 : vector<8x5x64xbf16> to vector<8x5x64xf32>
    %cst = arith.constant dense<0.000000e+00> : vector<8x5xf32>
    %6 = vector.multi_reduction <add>, %5, %cst [2] : vector<8x5x64xf32> to vector<8x5xf32>
    %cst_4 = arith.constant 0.000000e+00 : f32
    %7 = vector.broadcast %cst_4 : f32 to vector<8x3xf32>
    %8 = tpu.concatenate %6, %7 in 1 : vector<8x5xf32>, vector<8x3xf32> -> vector<8x8xf32>
    %9 = tpu.transpose %8, [1, 0] : vector<8x8xf32> -> vector<8x8xf32>
    %c0_5 = arith.constant 0 : index
    %c0_6 = arith.constant 0 : index
    %10 = vector.load %arg3[%c0_5, %c0_6] : memref<8x8xf32, #tpu.memory_space<vmem>>, vector<8x8xf32>
    tpu.vector_store %arg3[%c0_5, %c0_6], %9 {strides = array<i32>} : memref<8x8xf32, #tpu.memory_space<vmem>>, vector<8x8xf32>,
    return
  }
  func.func @transform_0(%arg0: i32) -> (i32, i32) {
    %c0_i32 = arith.constant 0 : i32
    %c0_i32_0 = arith.constant 0 : i32
    return %arg0, %c0_i32 : i32, i32
  }
  func.func @transform_1(%arg0: i32) -> (i32, i32, i32) {
    %c0_i32 = arith.constant 0 : i32
    %c0_i32_0 = arith.constant 0 : i32
    %c0_i32_1 = arith.constant 0 : i32
    return %arg0, %c0_i32, %c0_i32_0 : i32, i32, i32
  }
  func.func @transform_2(%arg0: i32) -> (i32, i32) {
    %c0_i32 = arith.constant 0 : i32
    %c0_i32_0 = arith.constant 0 : i32
    return %c0_i32, %arg0 : i32, i32
  }
}

</mosaic_0001>

<llo_original>
// kernel: tpu_custom_call.1
$region0: #{tpu_custom_call.1}
  #allocation0 [shape = 'u32[]', space=smem, size = 0x4, offset = 0x4, fixed_abs, tag = 'smem constant byte address 0x4 - core index']
  #allocation1 [shape = 'u32[144,128]{1,0:T(1,128)}', space=vmem, size = 0x12000, scoped, tag = 'internal scratch']
  %s0 = inlined_call_operand.vmem [shape: bf16[8,64], index: 0, kind: input, shape index: {}]
  %s1 = inlined_call_operand.vmem [shape: bf16[8,5,64], index: 1, kind: input, shape index: {}]
  %s2 = inlined_call_operand.hbm [shape: f32[8,8], index: 2, kind: output, shape index: {}]
  %s3 = sld [smem:[#allocation0]]
  $region18: #{tpu_custom_call.1} parent=0
    _
  %s5 = ssub.s32 1, %s3
  %s6 = scalar_select 0, %s5, %s3
  $region1: #{tpu_custom_call.1} parent=0
    #allocation2 [shape = 'u8[4096]{0}', space=vmem, size = 0x1000, scoped, tag = 'output window, operand 0, single buffered']
    #allocation3 [shape = 's32[1]{0}', space=sflag, size = 0x4, scoped, tag = 'scoped memory for tpu_custom_call.1']
    %7 = vsyncpa [#allocation3], 0
    // Predicated region
    $region2: #{tpu_custom_call.1} parent=1 // pred_check
      _
    $region3: #{tpu_custom_call.1} parent=1 // pred_check_branch
      %9 = sbr.rel (0) target = $region5
    $region4: #{tpu_custom_call.1} parent=1 // pred_region
      _
    $region5: #{tpu_custom_call.1} parent=1 // pred_fallthru
      _
    // Predicated region
    $region6: #{tpu_custom_call.1} parent=1 // pred_check
      _
    $region7: #{tpu_custom_call.1} parent=1 // pred_check_branch
      %11 = sbr.rel (0) target = $region9
    $region8: #{tpu_custom_call.1} parent=1 // pred_region
      _
    $region9: #{tpu_custom_call.1} parent=1 // pred_fallthru
      _
    %v12 = vld [vmem:[%s0] sm:$0xf]
    %v13 = vld [vmem:[%s1] sm:$0x7]
    %v14 = vld [vmem:[%s1 + $0x4] sm:$0x7]
    %v15 = vld [vmem:[%s1 + $0x8] sm:$0x7]
    %v16 = vld [vmem:[%s1 + $0xc] sm:$0x7]
    %v17 = vld [vmem:[%s1 + $0x10] sm:$0x7]
    %v18 = vld [vmem:[%s1 + $0x14] sm:$0x7]
    %v19 = vld [vmem:[%s1 + $0x18] sm:$0x7]
    %v20 = vld [vmem:[%s1 + $0x1c] sm:$0x7]
    %v23 = vunpack.c.l.s4 1966171168
    %v24 = vunpack.c.0.s8 %v23
    %v25 = vlaneseq
    %v26 = vshrl.u32 %v25, 7
    %v27 = vsub.s32 %v24, %v26
    %v28 = vrot.slane %v12, %v27
    %v29 = vcombine.high %v28, %v28
    %v31 = vunpack.c.l.s4 1966171168
    %v32 = vunpack.c.0.s8 %v31
    %v33 = vlaneseq
    %v34 = vshrl.u32 %v33, 7
    %v35 = vsub.s32 %v32, %v34
    %v36 = vrot.slane %v28, %v35
    %v38 = vunpack.c.l.s4 1966171168
    %v39 = vunpack.c.0.s8 %v38
    %v40 = vlaneseq
    %v41 = vshrl.u32 %v40, 7
    %v42 = vsub.s32 %v39, %v41
    %v43 = vrot.slane %v29, %v42
    %v44 = vcombine.high %v36, %v36
    %v45 = vcombine.high %v43, %v43
    %v46 = vunpack.i.l.s16 %v36
    %v47 = vunpack.i.h.s16 %v36
    %v48 = vunpack.i.l.s16 %v43
    %v49 = vunpack.i.h.s16 %v43
    %v50 = vunpack.i.l.s16 %v44
    %v51 = vunpack.i.h.s16 %v44
    %v52 = vunpack.i.l.s16 %v45
    %v53 = vunpack.i.h.s16 %v45
    %v54 = vpack.i.b16 %v46, %v46
    %v55 = vpack.i.b16 %v47, %v47
    %v56 = vpack.i.b16 %v48, %v48
    %v57 = vpack.i.b16 %v49, %v49
    %v58 = vpack.i.b16 %v50, %v50
    %v59 = vpack.i.b16 %v51, %v51
    %v60 = vpack.i.b16 %v52, %v52
    %v61 = vpack.i.b16 %v53, %v53
    %v62 = vlaneseq
    %v63 = vshrl.u32 %v62, 7
    %v64 = vsub.s32 0, %v63
    %v65 = vrot.slane %v54, %v64
    %v66 = vlaneseq
    %v67 = vshrl.u32 %v66, 7
    %v68 = vsub.s32 0, %v67
    %v69 = vrot.slane %v55, %v68
    %v70 = vlaneseq
    %v71 = vshrl.u32 %v70, 7
    %v72 = vsub.s32 0, %v71
    %v73 = vrot.slane %v56, %v72
    %v74 = vlaneseq
    %v75 = vshrl.u32 %v74, 7
    %v76 = vsub.s32 0, %v75
    %v77 = vrot.slane %v57, %v76
    %v78 = vlaneseq
    %v79 = vshrl.u32 %v78, 7
    %v80 = vsub.s32 0, %v79
    %v81 = vrot.slane %v58, %v80
    %v82 = vlaneseq
    %v83 = vshrl.u32 %v82, 7
    %v84 = vsub.s32 0, %v83
    %v85 = vrot.slane %v59, %v84
    %v86 = vlaneseq
    %v87 = vshrl.u32 %v86, 7
    %v88 = vsub.s32 0, %v87
    %v89 = vrot.slane %v60, %v88
    %v90 = vlaneseq
    %v91 = vshrl.u32 %v90, 7
    %v92 = vsub.s32 0, %v91
    %v93 = vrot.slane %v61, %v92
    %v95 = vpack.i.b16 %v65, %v65
    %v97 = vlaneseq
    %v98 = vshrl.u32 %v97, 7
    %v99 = vsub.s32 0, %v98
    %v100 = vrot.slane %v95, %v99
    %v102 = vpack.i.b16 %v69, %v69
    %v104 = vlaneseq
    %v105 = vshrl.u32 %v104, 7
    %v106 = vsub.s32 0, %v105
    %v107 = vrot.slane %v102, %v106
    %v109 = vpack.i.b16 %v73, %v73
    %v111 = vlaneseq
    %v112 = vshrl.u32 %v111, 7
    %v113 = vsub.s32 0, %v112
    %v114 = vrot.slane %v109, %v113
    %v116 = vpack.i.b16 %v77, %v77
    %v118 = vlaneseq
    %v119 = vshrl.u32 %v118, 7
    %v120 = vsub.s32 0, %v119
    %v121 = vrot.slane %v116, %v120
    %v123 = vpack.i.b16 %v81, %v81
    %v125 = vlaneseq
    %v126 = vshrl.u32 %v125, 7
    %v127 = vsub.s32 0, %v126
    %v128 = vrot.slane %v123, %v127
    %v130 = vpack.i.b16 %v85, %v85
    %v132 = vlaneseq
    %v133 = vshrl.u32 %v132, 7
    %v134 = vsub.s32 0, %v133
    %v135 = vrot.slane %v130, %v134
    %v137 = vpack.i.b16 %v89, %v89
    %v139 = vlaneseq
    %v140 = vshrl.u32 %v139, 7
    %v141 = vsub.s32 0, %v140
    %v142 = vrot.slane %v137, %v141
    %v144 = vpack.i.b16 %v93, %v93
    %v146 = vlaneseq
    %v147 = vshrl.u32 %v146, 7
    %v148 = vsub.s32 0, %v147
    %v149 = vrot.slane %v144, %v148
    %v150 = vmul.bf16 %v13, %v100
    %v151 = vmul.bf16 %v14, %v107
    %v152 = vmul.bf16 %v15, %v114
    %v153 = vmul.bf16 %v16, %v121
    %v154 = vmul.bf16 %v17, %v128
    %v155 = vmul.bf16 %v18, %v135
    %v156 = vmul.bf16 %v19, %v142
    %v157 = vmul.bf16 %v20, %v149
    %v158 = vunpack.c.l.bf16 %v150
    %v159 = vunpack.c.l.bf16 %v151
    %v160 = vunpack.c.l.bf16 %v152
    %v161 = vunpack.c.l.bf16 %v153
    %v162 = vunpack.c.l.bf16 %v154
    %v163 = vunpack.c.l.bf16 %v155
    %v164 = vunpack.c.l.bf16 %v156
    %v165 = vunpack.c.l.bf16 %v157
    %vm166 = vcmask 520192
    %v167 = vsel %vm166, %v158, 0.0
    %168 = vadd.xlane.f32.xlu0 %v167
    %v169 = vpop.xlane.xlu0 %168
    %v170 = vsel %vm166, %v159, 0.0
    %171 = vadd.xlane.f32.xlu0 %v170
    %v172 = vpop.xlane.xlu0 %171
    %v173 = vsel %vm166, %v160, 0.0
    %174 = vadd.xlane.f32.xlu0 %v173
    %v175 = vpop.xlane.xlu0 %174
    %v176 = vsel %vm166, %v161, 0.0
    %177 = vadd.xlane.f32.xlu0 %v176
    %v178 = vpop.xlane.xlu0 %177
    %v179 = vsel %vm166, %v162, 0.0
    %180 = vadd.xlane.f32.xlu0 %v179
    %v181 = vpop.xlane.xlu0 %180
    %v182 = vsel %vm166, %v163, 0.0
    %183 = vadd.xlane.f32.xlu0 %v182
    %v184 = vpop.xlane.xlu0 %183
    %v185 = vsel %vm166, %v164, 0.0
    %186 = vadd.xlane.f32.xlu0 %v185
    %v187 = vpop.xlane.xlu0 %186
    %v188 = vsel %vm166, %v165, 0.0
    %189 = vadd.xlane.f32.xlu0 %v188
    %v190 = vpop.xlane.xlu0 %189
    %v199 = vlaneseq
    %v200 = vand.u32 %v199, 127
    %v201 = vlaneseq
    %v202 = vshrl.u32 %v201, 7
    %v203 = vsub.s32 %v200, %v202
    %v204 = vrot.slane %v169, %v203
    %v205 = vlaneseq
    %v206 = vshrl.u32 %v205, 7
    %v207 = vsub.s32 %v200, %v206
    %v208 = vrot.slane %v172, %v207
    %v209 = vlaneseq
    %v210 = vshrl.u32 %v209, 7
    %v211 = vsub.s32 %v200, %v210
    %v212 = vrot.slane %v175, %v211
    %v213 = vlaneseq
    %v214 = vshrl.u32 %v213, 7
    %v215 = vsub.s32 %v200, %v214
    %v216 = vrot.slane %v178, %v215
    %v217 = vlaneseq
    %v218 = vshrl.u32 %v217, 7
    %v219 = vsub.s32 %v200, %v218
    %v220 = vrot.slane %v181, %v219
    %v221 = vlaneseq
    %v222 = vshrl.u32 %v221, 7
    %v223 = vsub.s32 %v200, %v222
    %v224 = vrot.slane %v184, %v223
    %v225 = vlaneseq
    %v226 = vshrl.u32 %v225, 7
    %v227 = vsub.s32 %v200, %v226
    %v228 = vrot.slane %v187, %v227
    %v229 = vlaneseq
    %v230 = vshrl.u32 %v229, 7
    %v231 = vsub.s32 %v200, %v230
    %v232 = vrot.slane %v190, %v231
    %vm233 = vcmask 1041409
    %v234 = vsel %vm233, %v208, %v204
    %vm235 = vcmask 1042434
    %v236 = vsel %vm235, %v212, %v234
    %vm237 = vcmask 1043459
    %v238 = vsel %vm237, %v216, %v236
    %vm239 = vcmask 1044484
    %v240 = vsel %vm239, %v220, %v238
    %vm241 = vcmask 1045509
    %v242 = vsel %vm241, %v224, %v240
    %vm243 = vcmask 1046534
    %v244 = vsel %vm243, %v228, %v242
    %vm245 = vcmask 1047559
    %v246 = vsel %vm245, %v232, %v244
    %vm248 = vcmask 39936
    %v249 = vsel %vm248, %v246, 0.0
    %250 = vxpose.xlu0.b32.start [1/16] %v249, 128
    %251 = vxpose.xlu0.b32.cont [2/16] 0.0, 128
    %252 = vxpose.xlu0.b32.cont [3/16] 0.0, 128
    %253 = vxpose.xlu0.b32.cont [4/16] 0.0, 128
    %254 = vxpose.xlu0.b32.cont [5/16] 0.0, 128
    %255 = vxpose.xlu0.b32.cont [6/16] 0.0, 128
    %256 = vxpose.xlu0.b32.cont [7/16] 0.0, 128
    %257 = vxpose.xlu0.b32.cont [8/16] 0.0, 128
    %258 = vxpose.xlu0.b32.cont [9/16] 0.0, 128
    %259 = vxpose.xlu0.b32.cont [10/16] 0.0, 128
    %260 = vxpose.xlu0.b32.cont [11/16] 0.0, 128
    %261 = vxpose.xlu0.b32.cont [12/16] 0.0, 128
    %262 = vxpose.xlu0.b32.cont [13/16] 0.0, 128
    %263 = vxpose.xlu0.b32.cont [14/16] 0.0, 128
    %264 = vxpose.xlu0.b32.cont [15/16] 0.0, 128
    %265 = vxpose.xlu0.b32.end [16/16] 0.0, 128
    %v266 = vpop.trf.xlu0
    %v267 = vpop.trf.xlu0
    %v268 = vpop.trf.xlu0
    %v269 = vpop.trf.xlu0
    %v270 = vpop.trf.xlu0
    %v271 = vpop.trf.xlu0
    %v272 = vpop.trf.xlu0
    %v273 = vpop.trf.xlu0
    %v274 = vpop.trf.xlu0
    %v275 = vpop.trf.xlu0
    %v276 = vpop.trf.xlu0
    %v277 = vpop.trf.xlu0
    %v278 = vpop.trf.xlu0
    %v279 = vpop.trf.xlu0
    %v280 = vpop.trf.xlu0
    %v281 = vpop.trf.xlu0
    %vm282 = vcmask 64512
    %283 = vst.msk [vmem:[#allocation2] sm:$0xff] %vm282, %v266
    // Predicated region
    $region10: #{tpu_custom_call.1} parent=1 // pred_check
      _
    $region11: #{tpu_custom_call.1} parent=1 // pred_check_branch
      %285 = sbr.rel (0) target = $region13
    $region12: #{tpu_custom_call.1} parent=1 // pred_region
      %s287 = ssub.s32 128, 128
      %288 = vsyncadd [#allocation3], %s287
      %s290 = sshll.u32 [#allocation2], 4
      %s291 = int_to_ptr.vmem [resolvable:$true] %s290
      %293 = dma.vmem_to_hbm [thread:$0]  %s291, 128, %s2, [#allocation3]
    $region13: #{tpu_custom_call.1} parent=1 // pred_fallthru
      _
    // Predicated region
    $region14: #{tpu_custom_call.1} parent=1 // pred_check
      _
    $region15: #{tpu_custom_call.1} parent=1 // pred_check_branch
      %295 = sbr.rel (0) target = $region17
    $region16: #{tpu_custom_call.1} parent=1 // pred_region
      %296 = dma.done [#allocation3], 128
    $region17: #{tpu_custom_call.1} parent=1 // pred_fallthru
      _
    %297 = vsyncpa [#allocation3], 1

</llo_original>
